<compile_context>
chip_gen: v5e
topology: v5e:2x2
jax: 0.10.0
libtpu: 0.0.40
codegen_flags: <defaults>
</compile_context>

<pallas_src>
import jax
import jax.numpy as jnp
from jax.experimental import pallas as pl
from jax.experimental.pallas import tpu as pltpu


_G = 8                                   # batch rows packed per sublane row
_D_IN, _D_H, _D_OUT = 10, 20, 30
_GIN, _GH, _GOUT = _G * _D_IN, _G * _D_H, _G * _D_OUT     # 80, 160, 240

# Packed parameter slab, f32 (336, 240).  All row starts are multiples of 8
# (sublane aligned) and every kernel slice is full-width (sublane-only
# slicing).  Unused regions are zero.
#   rows   0: 80, cols 0:160 -> block_diag(W1) x8   (80, 160)
#   row   80,     cols 0:160 -> tile(b1, 8)         ( 1, 160)
#   rows  88:248, cols 0:240 -> block_diag(W2) x8   (160, 240)
#   row  328,     cols 0:240 -> tile(b2, 8)         ( 1, 240)
_W1_ROW, _B1_ROW, _W2_ROW, _B2_ROW = 0, 80, 88, 328
_SLAB_SHAPE = (336, 240)


def _block_diag(m, g):
    r, c = m.shape
    out = jnp.zeros((g * r, g * c), m.dtype)
    for i in range(g):
        out = out.at[i * r:(i + 1) * r, i * c:(i + 1) * c].set(m)
    return out


def pack_params(w1, b1, w2, b2):
    """w1:(10,20) b1:(1,20) w2:(20,30) b2:(1,30), stored (in, out) — i.e.
    transposed relative to PyTorch's Linear.weight (out, in)."""
    b1 = b1.reshape(1, _D_H)
    b2 = b2.reshape(1, _D_OUT)
    p = jnp.zeros(_SLAB_SHAPE, jnp.float32)
    p = p.at[_W1_ROW:_W1_ROW + _GIN, 0:_GH].set(_block_diag(w1, _G))
    p = p.at[_B1_ROW:_B1_ROW + 1, 0:_GH].set(jnp.tile(b1, (1, _G)))
    p = p.at[_W2_ROW:_W2_ROW + _GH, 0:_GOUT].set(_block_diag(w2, _G))
    p = p.at[_B2_ROW:_B2_ROW + 1, 0:_GOUT].set(jnp.tile(b2, (1, _G)))
    return p


def _mlp_kernel(x_ref, p_ref, o_ref):
    # Full-width, sublane-aligned static slices out of the resident slab.
    w1 = p_ref[_W1_ROW:_W1_ROW + _GIN, :]    # (80, 240); cols >= 160 are zero
    b1 = p_ref[_B1_ROW:_B1_ROW + 1, :]       # ( 1, 240); cols >= 160 are zero
    w2 = p_ref[_W2_ROW:_W2_ROW + _GOUT, :]   # (240,240); rows >= 160 are zero
    b2 = p_ref[_B2_ROW:_B2_ROW + 1, :]       # ( 1, 240)
    # Layer 1, 8 batch rows per sublane row: (R, 80) @ (80, 240) + (1, 240).
    h = jnp.dot(x_ref[...], w1, preferred_element_type=jnp.float32) + b1
    # Layer 2: (R, 240) @ (240, 240) + (1, 240).  The zero tail of h hits the
    # zero rows of w2, so the padding never contaminates the result.
    y = jnp.dot(h, w2, preferred_element_type=jnp.float32) + b2
    o_ref[...] = y.astype(o_ref.dtype)


def small_model_forward(x, params, *, block_b=8192):
    """y = (x @ W1 + b1) @ W2 + b2 for x of shape (B, 10); returns (B, 30)."""
    B = x.shape[0]
    dtype = x.dtype

    # Lane-dense regrouping: 8 batch rows -> 1 sublane row (free reshape).
    B8 = ((B + _G - 1) // _G) * _G
    if B8 != B:
        # TODO(synk): rare tail case (B % 8 != 0) pays one pad + one slice
        # copy; a dedicated remainder call would avoid it if it ever matters.
        x = jnp.pad(x, ((0, B8 - B), (0, 0)))
    rows = B8 // _G
    xg = x.reshape(rows, _GIN)               # free bitcast (row-major)

    itemsize = jnp.dtype(dtype).itemsize
    cost = pl.CostEstimate(
        flops=2 * B * (_D_IN * _D_H + _D_H * _D_OUT),
        transcendentals=0,
        bytes_accessed=B * (_D_IN + _D_OUT) * itemsize + params.size * 4,
    )

    # Row-groups per grid step (multiple of 8); block_b is in original rows.
    br = max(8, (block_b // _G) // 8 * 8)

    if rows <= br:
        # Single-tile path: no grid, no pipeline prologue/epilogue, 2 operands,
        # everything VMEM-resident.
        out = pl.pallas_call(
            _mlp_kernel,
            out_shape=jax.ShapeDtypeStruct((rows, _GOUT), dtype),
            in_specs=[
                pl.BlockSpec(memory_space=pltpu.MemorySpace.VMEM),
                pl.BlockSpec(memory_space=pltpu.MemorySpace.VMEM),
            ],
            out_specs=pl.BlockSpec(memory_space=pltpu.MemorySpace.VMEM),
            cost_estimate=cost,
        )(xg, params)
    else:
        # Large-batch path: stream x / y in lane-dense batch tiles; params stay
        # resident (constant index_map).  grid = cdiv -> ragged last block is
        # masked by Pallas (no host-side pad / slice round-trips).
        n_tiles = pl.cdiv(rows, br)
        out = pl.pallas_call(
            _mlp_kernel,
            out_shape=jax.ShapeDtypeStruct((rows, _GOUT), dtype),
            grid=(n_tiles,),
            in_specs=[
                pl.BlockSpec((br, _GIN), lambda i: (i, 0)),
                pl.BlockSpec(_SLAB_SHAPE, lambda i: (0, 0)),
            ],
            out_specs=pl.BlockSpec((br, _GOUT), lambda i: (i, 0)),
            compiler_params=pltpu.CompilerParams(
                dimension_semantics=("parallel",),
                vmem_limit_bytes=32 * 1024 * 1024,
            ),
            cost_estimate=cost,
        )(xg, params)

    y = out.reshape(B8, _D_OUT)              # free bitcast back to (B8, 30)
    return y if B8 == B else y[:B]


def init_params(key):
    # Mimic torch.nn.Linear default init: U(-1/sqrt(fan_in), 1/sqrt(fan_in)).
    k1, k2, k3, k4 = jax.random.split(key, 4)
    bound1 = 1.0 / jnp.sqrt(10.0)
    bound2 = 1.0 / jnp.sqrt(20.0)
    # Stored as (in, out) — transposed relative to PyTorch's (out, in).
    w1 = jax.random.uniform(k1, (10, 20), jnp.float32, -bound1, bound1)
    b1 = jax.random.uniform(k2, (1, 20), jnp.float32, -bound1, bound1)
    w2 = jax.random.uniform(k3, (20, 30), jnp.float32, -bound2, bound2)
    b2 = jax.random.uniform(k4, (1, 30), jnp.float32, -bound2, bound2)
    return w1, b1, w2, b2


if __name__ == "__main__":
    key = jax.random.PRNGKey(0)
    kx, kp = jax.random.split(key)
    w1, b1, w2, b2 = init_params(kp)
    params = pack_params(w1, b1, w2, b2)

    def reference(x):
        return (x @ w1 + b1) @ w2 + b2

    # 1) Tiny batch -> single-tile, no-grid path.
    x_small = jax.random.normal(kx, (8, 10), jnp.float32)
    out_small = jax.block_until_ready(small_model_forward(x_small, params))
    assert out_small.shape == (8, 30)
    assert jnp.allclose(out_small, reference(x_small), atol=1e-4, rtol=1e-5)

    # 2) Gridded path with a ragged last tile (125 row-groups, 32 per step).
    x_big = jax.random.normal(kx, (1000, 10), jnp.float32)
    out_big = jax.block_until_ready(
        small_model_forward(x_big, params, block_b=256))
    assert out_big.shape == (1000, 30)
    assert jnp.allclose(out_big, reference(x_big), atol=1e-4, rtol=1e-5)

    # 3) Batch not a multiple of 8 -> exercises the tail-pad path.
    x_odd = jax.random.normal(kx, (13, 10), jnp.float32)
    out_odd = jax.block_until_ready(small_model_forward(x_odd, params))
    assert out_odd.shape == (13, 30)
    assert jnp.allclose(out_odd, reference(x_odd), atol=1e-4, rtol=1e-5)

    print("KERNEL_OK")
</pallas_src>

<mosaic_0001>
module attributes {stable_mosaic.version = 11 : i64} {
  func.func @_mlp_kernel(%arg0: memref<1x80xf32, #tpu.memory_space<vmem>>, %arg1: memref<336x240xf32, #tpu.memory_space<vmem>>, %arg2: memref<1x240xf32, #tpu.memory_space<vmem>>) attributes {dimension_semantics = [], scalar_prefetch = 0 : i64, scratch_operands = 0 : i64, tpu.core_type = #tpu.core_type<tc>} {
    %c0 = arith.constant 0 : index
    %c0_0 = arith.constant 0 : index
    %0 = vector.load %arg1[%c0, %c0_0] : memref<336x240xf32, #tpu.memory_space<vmem>>, vector<80x240xf32>
    %c80 = arith.constant 80 : index
    %c0_1 = arith.constant 0 : index
    %1 = vector.load %arg1[%c80, %c0_1] : memref<336x240xf32, #tpu.memory_space<vmem>>, vector<1x240xf32>
    %c88 = arith.constant 88 : index
    %c0_2 = arith.constant 0 : index
    %2 = vector.load %arg1[%c88, %c0_2] : memref<336x240xf32, #tpu.memory_space<vmem>>, vector<240x240xf32>
    %c328 = arith.constant 328 : index
    %c0_3 = arith.constant 0 : index
    %3 = vector.load %arg1[%c328, %c0_3] : memref<336x240xf32, #tpu.memory_space<vmem>>, vector<1x240xf32>
    %c0_4 = arith.constant 0 : index
    %c0_5 = arith.constant 0 : index
    %4 = vector.load %arg0[%c0_4, %c0_5] : memref<1x80xf32, #tpu.memory_space<vmem>>, vector<1x80xf32>
    %cst = arith.constant dense<0.000000e+00> : vector<1x240xf32>
    %5 = tpu.matmul %4, %0, %cst {dimension_numbers = #tpu.dot_dimension_numbers<[1], [0], [0], [1], [0, 0, 1, 1], [], []>} : vector<1x80xf32>, vector<80x240xf32>, vector<1x240xf32> -> vector<1x240xf32>
    %6 = arith.addf %5, %1 : vector<1x240xf32>
    %cst_6 = arith.constant dense<0.000000e+00> : vector<1x240xf32>
    %7 = tpu.matmul %6, %2, %cst_6 {dimension_numbers = #tpu.dot_dimension_numbers<[1], [0], [0], [1], [0, 0, 1, 1], [], []>} : vector<1x240xf32>, vector<240x240xf32>, vector<1x240xf32> -> vector<1x240xf32>
    %8 = arith.addf %7, %3 : vector<1x240xf32>
    %c0_7 = arith.constant 0 : index
    %c0_8 = arith.constant 0 : index
    %9 = vector.load %arg2[%c0_7, %c0_8] : memref<1x240xf32, #tpu.memory_space<vmem>>, vector<1x240xf32>
    tpu.vector_store %arg2[%c0_7, %c0_8], %8 {strides = array<i32>} : memref<1x240xf32, #tpu.memory_space<vmem>>, vector<1x240xf32>,
    return
  }
}

</mosaic_0001>

<llo_original>
// kernel: tpu_custom_call.1
$region0: #{tpu_custom_call.1}
  #allocation0 [shape = 'u32[]', space=smem, size = 0x4, offset = 0x4, fixed_abs, tag = 'smem constant byte address 0x4 - core index']
  #allocation1 [shape = 'u32[72,128]{1,0:T(1,128)}', space=vmem, size = 0x9000, scoped, tag = 'internal scratch']
  %s0 = inlined_call_operand.hbm [shape: f32[1,80], index: 0, kind: input, shape index: {}]
  %s1 = inlined_call_operand.hbm [shape: f32[336,240], index: 1, kind: input, shape index: {}]
  %s2 = inlined_call_operand.hbm [shape: f32[1,240], index: 2, kind: output, shape index: {}]
  %s3 = sld [smem:[#allocation0]]
  $region26: #{tpu_custom_call.1} parent=0
    _
  %s5 = ssub.s32 1, %s3
  %s6 = scalar_select 0, %s5, %s3
  $region1: #{tpu_custom_call.1} parent=0
    #allocation2 [shape = 'u8[512]{0}', space=vmem, size = 0x400, scoped, tag = 'input window, operand 0, single buffered']
    #allocation3 [shape = 's32[1]{0}', space=sflag, size = 0x4, scoped, tag = 'scoped memory for tpu_custom_call.1']
    #allocation4 [shape = 's32[1]{0}', space=sflag, size = 0x4, scoped, tag = 'scoped memory for tpu_custom_call.1']
    #allocation5 [shape = 'u8[344064]{0}', space=vmem, size = 0x54000, scoped, tag = 'input window, operand 1, single buffered']
    #allocation6 [shape = 's32[1]{0}', space=sflag, size = 0x4, scoped, tag = 'scoped memory for tpu_custom_call.1']
    #allocation7 [shape = 'u8[1024]{0}', space=vmem, size = 0x400, scoped, tag = 'output window, operand 0, single buffered']
    %7 = vsyncpa [#allocation3], 0
    %8 = vsyncpa [#allocation6], 0
    %9 = vsyncpa [#allocation4], 0
    // Predicated region
    $region2: #{tpu_custom_call.1} parent=1 // pred_check
      _
    $region3: #{tpu_custom_call.1} parent=1 // pred_check_branch
      %11 = sbr.rel (0) target = $region5
    $region4: #{tpu_custom_call.1} parent=1 // pred_region
      %13 = vsyncadd [#allocation3], 0
      %s15 = sshll.u32 %s0, 4
      %s16 = int_to_ptr.hbm [resolvable:$true] %s15
      %s17 = sshll.u32 [#allocation2], 4
      %s18 = int_to_ptr.vmem [resolvable:$true] %s17
      %20 = dma.hbm_to_vmem [thread:$0]  %s16, 16, %s18, [#allocation3]
    $region5: #{tpu_custom_call.1} parent=1 // pred_fallthru
      _
    // Predicated region
    $region6: #{tpu_custom_call.1} parent=1 // pred_check
      _
    $region7: #{tpu_custom_call.1} parent=1 // pred_check_branch
      %22 = sbr.rel (0) target = $region9
    $region8: #{tpu_custom_call.1} parent=1 // pred_region
      %24 = vsyncadd [#allocation6], 0
      %s25 = sshll.u32 %s1, 4
      %s26 = int_to_ptr.hbm [resolvable:$true] %s25
      %s27 = sshll.u32 [#allocation5], 4
      %s28 = int_to_ptr.vmem [resolvable:$true] %s27
      %33 = dma.hbm_to_vmem [thread:$0]  %s26, 10752, %s28, [#allocation6], 256, 256, 16
    $region9: #{tpu_custom_call.1} parent=1 // pred_fallthru
      _
    // Predicated region
    $region10: #{tpu_custom_call.1} parent=1 // pred_check
      _
    $region11: #{tpu_custom_call.1} parent=1 // pred_check_branch
      %35 = sbr.rel (0) target = $region13
    $region12: #{tpu_custom_call.1} parent=1 // pred_region
      %37 = dma.done [#allocation3], 16
    $region13: #{tpu_custom_call.1} parent=1 // pred_fallthru
      _
    // Predicated region
    $region14: #{tpu_custom_call.1} parent=1 // pred_check
      _
    $region15: #{tpu_custom_call.1} parent=1 // pred_check_branch
      %39 = sbr.rel (0) target = $region17
    $region16: #{tpu_custom_call.1} parent=1 // pred_region
      %41 = dma.done [#allocation6], 10752
    $region17: #{tpu_custom_call.1} parent=1 // pred_fallthru
      _
    %v42 = vld [vmem:[#allocation5] sm:$0xff]
    %v43 = vld [vmem:[#allocation5 + $0x8] sm:$0xff]
    %v44 = vld [vmem:[#allocation5 + $0x10] sm:$0xff]
    %v45 = vld [vmem:[#allocation5 + $0x18] sm:$0xff]
    %v46 = vld [vmem:[#allocation5 + $0x20] sm:$0xff]
    %v47 = vld [vmem:[#allocation5 + $0x28] sm:$0xff]
    %v48 = vld [vmem:[#allocation5 + $0x30] sm:$0xff]
    %v49 = vld [vmem:[#allocation5 + $0x38] sm:$0xff]
    %v50 = vld [vmem:[#allocation5 + $0x40] sm:$0xff]
    %v51 = vld [vmem:[#allocation5 + $0x48] sm:$0xff]
    %v52 = vld [vmem:[#allocation5 + $0x50] sm:$0xff]
    %v53 = vld [vmem:[#allocation5 + $0x58] sm:$0xff]
    %v54 = vld [vmem:[#allocation5 + $0x60] sm:$0xff]
    %v55 = vld [vmem:[#allocation5 + $0x68] sm:$0xff]
    %v56 = vld [vmem:[#allocation5 + $0x70] sm:$0xff]
    %v57 = vld [vmem:[#allocation5 + $0x78] sm:$0xff]
    %v58 = vld [vmem:[#allocation5 + $0x80] sm:$0xff]
    %v59 = vld [vmem:[#allocation5 + $0x88] sm:$0xff]
    %v60 = vld [vmem:[#allocation5 + $0x90] sm:$0xff]
    %v61 = vld [vmem:[#allocation5 + $0x98] sm:$0xff]
    %s62 = scalar_lea.vmem [#allocation5], 160
    %v63 = vld [vmem:[%s62] ss:$8 sm:$0x3]
    %v64 = vld [vmem:[#allocation5 + $0xb0] sm:$0xff]
    %v65 = vld [vmem:[#allocation5 + $0xb8] sm:$0xff]
    %v66 = vld [vmem:[#allocation5 + $0xc0] sm:$0xff]
    %v67 = vld [vmem:[#allocation5 + $0xc8] sm:$0xff]
    %v68 = vld [vmem:[#allocation5 + $0xd0] sm:$0xff]
    %v69 = vld [vmem:[#allocation5 + $0xd8] sm:$0xff]
    %v70 = vld [vmem:[#allocation5 + $0xe0] sm:$0xff]
    %v71 = vld [vmem:[#allocation5 + $0xe8] sm:$0xff]
    %v72 = vld [vmem:[#allocation5 + $0xf0] sm:$0xff]
    %v73 = vld [vmem:[#allocation5 + $0xf8] sm:$0xff]
    %v74 = vld [vmem:[#allocation5 + $0x100] sm:$0xff]
    %v75 = vld [vmem:[#allocation5 + $0x108] sm:$0xff]
    %v76 = vld [vmem:[#allocation5 + $0x110] sm:$0xff]
    %v77 = vld [vmem:[#allocation5 + $0x118] sm:$0xff]
    %v78 = vld [vmem:[#allocation5 + $0x120] sm:$0xff]
    %v79 = vld [vmem:[#allocation5 + $0x128] sm:$0xff]
    %v80 = vld [vmem:[#allocation5 + $0x130] sm:$0xff]
    %v81 = vld [vmem:[#allocation5 + $0x138] sm:$0xff]
    %v82 = vld [vmem:[#allocation5 + $0x140] sm:$0xff]
    %v83 = vld [vmem:[#allocation5 + $0x148] sm:$0xff]
    %v84 = vld [vmem:[#allocation5 + $0x150] sm:$0xff]
    %v85 = vld [vmem:[#allocation5 + $0x158] sm:$0xff]
    %v86 = vld [vmem:[#allocation5 + $0x160] sm:$0xff]
    %v87 = vld [vmem:[#allocation5 + $0x168] sm:$0xff]
    %v88 = vld [vmem:[#allocation5 + $0x170] sm:$0xff]
    %v89 = vld [vmem:[#allocation5 + $0x178] sm:$0xff]
    %v90 = vld [vmem:[#allocation5 + $0x180] sm:$0xff]
    %v91 = vld [vmem:[#allocation5 + $0x188] sm:$0xff]
    %v92 = vld [vmem:[#allocation5 + $0x190] sm:$0xff]
    %v93 = vld [vmem:[#allocation5 + $0x198] sm:$0xff]
    %v94 = vld [vmem:[#allocation5 + $0x1a0] sm:$0xff]
    %v95 = vld [vmem:[#allocation5 + $0x1a8] sm:$0xff]
    %v96 = vld [vmem:[#allocation5 + $0x1b0] sm:$0xff]
    %v97 = vld [vmem:[#allocation5 + $0x1b8] sm:$0xff]
    %v98 = vld [vmem:[#allocation5 + $0x1c0] sm:$0xff]
    %v99 = vld [vmem:[#allocation5 + $0x1c8] sm:$0xff]
    %v100 = vld [vmem:[#allocation5 + $0x1d0] sm:$0xff]
    %v101 = vld [vmem:[#allocation5 + $0x1d8] sm:$0xff]
    %v102 = vld [vmem:[#allocation5 + $0x1e0] sm:$0xff]
    %v103 = vld [vmem:[#allocation5 + $0x1e8] sm:$0xff]
    %v104 = vld [vmem:[#allocation5 + $0x1f0] sm:$0xff]
    %v105 = vld [vmem:[#allocation5 + $0x1f8] sm:$0xff]
    %v106 = vld [vmem:[#allocation5 + $0x200] sm:$0xff]
    %v107 = vld [vmem:[#allocation5 + $0x208] sm:$0xff]
    %v108 = vld [vmem:[#allocation5 + $0x210] sm:$0xff]
    %v109 = vld [vmem:[#allocation5 + $0x218] sm:$0xff]
    %v110 = vld [vmem:[#allocation5 + $0x220] sm:$0xff]
    %v111 = vld [vmem:[#allocation5 + $0x228] sm:$0xff]
    %v112 = vld [vmem:[#allocation5 + $0x230] sm:$0xff]
    %v113 = vld [vmem:[#allocation5 + $0x238] sm:$0xff]
    %v114 = vld [vmem:[#allocation5 + $0x240] sm:$0xff]
    %v115 = vld [vmem:[#allocation5 + $0x248] sm:$0xff]
    %v116 = vld [vmem:[#allocation5 + $0x250] sm:$0xff]
    %v117 = vld [vmem:[#allocation5 + $0x258] sm:$0xff]
    %v118 = vld [vmem:[#allocation5 + $0x260] sm:$0xff]
    %v119 = vld [vmem:[#allocation5 + $0x268] sm:$0xff]
    %v120 = vld [vmem:[#allocation5 + $0x270] sm:$0xff]
    %v121 = vld [vmem:[#allocation5 + $0x278] sm:$0xff]
    %v122 = vld [vmem:[#allocation5 + $0x280] sm:$0xff]
    %v123 = vld [vmem:[#allocation5 + $0x288] sm:$0xff]
    %s124 = scalar_lea.vmem [#allocation5], 656
    %v125 = vld [vmem:[%s124] ss:$8 sm:$0x3]
    %v126 = vld [vmem:[#allocation2] sm:$0x1]
    %v128 = vperm.slane %v63, 0
    %v129 = vperm.slane %v63, 1
    %vm132 = vcmask 654336
    %v134 = vsel %vm132, %v126, 0
    %136 = vmatpush.msra.mxu0 0.0
    %137 = vmatpush.msra.mxu0 0.0
    %138 = vmatpush.msra.mxu0 0.0
    %139 = vmatpush.msra.mxu0 0.0
    %140 = vmatpush.msra.mxu0 0.0
    %141 = vmatpush.msra.mxu0 0.0
    %142 = vmatpush.msra.mxu0 %v60
    %143 = vmatpush.msra.mxu0 %v58
    %144 = vmatpush.msra.mxu0 %v56
    %145 = vmatpush.msra.mxu0 %v54
    %146 = vmatpush.msra.mxu0 %v52
    %147 = vmatpush.msra.mxu0 %v50
    %148 = vmatpush.msra.mxu0 %v48
    %149 = vmatpush.msra.mxu0 %v46
    %150 = vmatpush.msra.mxu0 %v44
    %151 = vmatpush.msra.mxu0 %v42
    %152 = vmatmul.f32.gmra.mxu0 %v134
    %v153 = vpop.f32.mrf.mxu0
    %v154 = vadd.f32 %v128, %v153
    %155 = vdwg.mxu0
    %156 = vmatpush.msra.mxu0 0.0
    %157 = vmatpush.msra.mxu0 0.0
    %158 = vmatpush.msra.mxu0 0.0
    %159 = vmatpush.msra.mxu0 0.0
    %160 = vmatpush.msra.mxu0 0.0
    %161 = vmatpush.msra.mxu0 0.0
    %162 = vmatpush.msra.mxu0 %v61
    %163 = vmatpush.msra.mxu0 %v59
    %164 = vmatpush.msra.mxu0 %v57
    %165 = vmatpush.msra.mxu0 %v55
    %166 = vmatpush.msra.mxu0 %v53
    %167 = vmatpush.msra.mxu0 %v51
    %168 = vmatpush.msra.mxu0 %v49
    %169 = vmatpush.msra.mxu0 %v47
    %170 = vmatpush.msra.mxu0 %v45
    %171 = vmatpush.msra.mxu0 %v43
    %172 = vmatmul.f32.gmra.mxu0 %v134
    %v173 = vpop.f32.mrf.mxu0
    %v174 = vadd.f32 %v129, %v173
    %175 = vdwg.mxu0
    %v177 = vperm.slane %v125, 0
    %v178 = vperm.slane %v125, 1
    %vm181 = vcmask 916480
    %v183 = vsel %vm181, %v174, 0
    %185 = vmatpush.msra.mxu0 %v94
    %186 = vmatpush.msra.mxu0 %v92
    %187 = vmatpush.msra.mxu0 %v90
    %188 = vmatpush.msra.mxu0 %v88
    %189 = vmatpush.msra.mxu0 %v86
    %190 = vmatpush.msra.mxu0 %v84
    %191 = vmatpush.msra.mxu0 %v82
    %192 = vmatpush.msra.mxu0 %v80
    %193 = vmatpush.msra.mxu0 %v78
    %194 = vmatpush.msra.mxu0 %v76
    %195 = vmatpush.msra.mxu0 %v74
    %196 = vmatpush.msra.mxu0 %v72
    %197 = vmatpush.msra.mxu0 %v70
    %198 = vmatpush.msra.mxu0 %v68
    %199 = vmatpush.msra.mxu0 %v66
    %200 = vmatpush.msra.mxu0 %v64
    %201 = vmatmul.f32.gmra.mxu0 %v154
    %v202 = vpop.f32.mrf.mxu0
    %v203 = vadd.f32 %v177, %v202
    %204 = vdwg.mxu0
    %205 = vmatpush.msra.mxu0 0.0
    %206 = vmatpush.msra.mxu0 0.0
    %207 = vmatpush.msra.mxu0 %v122
    %208 = vmatpush.msra.mxu0 %v120
    %209 = vmatpush.msra.mxu0 %v118
    %210 = vmatpush.msra.mxu0 %v116
    %211 = vmatpush.msra.mxu0 %v114
    %212 = vmatpush.msra.mxu0 %v112
    %213 = vmatpush.msra.mxu0 %v110
    %214 = vmatpush.msra.mxu0 %v108
    %215 = vmatpush.msra.mxu0 %v106
    %216 = vmatpush.msra.mxu0 %v104
    %217 = vmatpush.msra.mxu0 %v102
    %218 = vmatpush.msra.mxu0 %v100
    %219 = vmatpush.msra.mxu0 %v98
    %220 = vmatpush.msra.mxu0 %v96
    %221 = vmatmul.f32.gmra.mxu0 %v183
    %v222 = vpop.f32.mrf.mxu0
    %v223 = vadd.f32 %v203, %v222
    %224 = vdwg.mxu0
    %225 = vmatpush.msra.mxu0 %v95
    %226 = vmatpush.msra.mxu0 %v93
    %227 = vmatpush.msra.mxu0 %v91
    %228 = vmatpush.msra.mxu0 %v89
    %229 = vmatpush.msra.mxu0 %v87
    %230 = vmatpush.msra.mxu0 %v85
    %231 = vmatpush.msra.mxu0 %v83
    %232 = vmatpush.msra.mxu0 %v81
    %233 = vmatpush.msra.mxu0 %v79
    %234 = vmatpush.msra.mxu0 %v77
    %235 = vmatpush.msra.mxu0 %v75
    %236 = vmatpush.msra.mxu0 %v73
    %237 = vmatpush.msra.mxu0 %v71
    %238 = vmatpush.msra.mxu0 %v69
    %239 = vmatpush.msra.mxu0 %v67
    %240 = vmatpush.msra.mxu0 %v65
    %241 = vmatmul.f32.gmra.mxu0 %v154
    %v242 = vpop.f32.mrf.mxu0
    %v243 = vadd.f32 %v178, %v242
    %244 = vdwg.mxu0
    %245 = vmatpush.msra.mxu0 0.0
    %246 = vmatpush.msra.mxu0 0.0
    %247 = vmatpush.msra.mxu0 %v123
    %248 = vmatpush.msra.mxu0 %v121
    %249 = vmatpush.msra.mxu0 %v119
    %250 = vmatpush.msra.mxu0 %v117
    %251 = vmatpush.msra.mxu0 %v115
    %252 = vmatpush.msra.mxu0 %v113
    %253 = vmatpush.msra.mxu0 %v111
    %254 = vmatpush.msra.mxu0 %v109
    %255 = vmatpush.msra.mxu0 %v107
    %256 = vmatpush.msra.mxu0 %v105
    %257 = vmatpush.msra.mxu0 %v103
    %258 = vmatpush.msra.mxu0 %v101
    %259 = vmatpush.msra.mxu0 %v99
    %260 = vmatpush.msra.mxu0 %v97
    %261 = vmatmul.f32.gmra.mxu0 %v183
    %v262 = vpop.f32.mrf.mxu0
    %v263 = vadd.f32 %v243, %v262
    %264 = vdwg.mxu0
    %v267 = vrot.slane %v263, 7
    %vm268 = vcmask 1040384
    %v269 = vsel %vm268, %v223, %v267
    %v271 = vlaneseq
    %vm272 = vcmp.ge.s32.totalorder %v271, 0
    %vm273 = vcmp.lt.s32.totalorder %v271, 240
    %vm274 = vmand %vm272, %vm273
    %275 = vst.msk [vmem:[#allocation7] sm:$0x3] %vm274, %v269
    // Predicated region
    $region18: #{tpu_custom_call.1} parent=1 // pred_check
      _
    $region19: #{tpu_custom_call.1} parent=1 // pred_check_branch
      %277 = sbr.rel (0) target = $region21
    $region20: #{tpu_custom_call.1} parent=1 // pred_region
      %279 = vsyncadd [#allocation4], 0
      %s281 = sshll.u32 [#allocation7], 4
      %s282 = int_to_ptr.vmem [resolvable:$true] %s281
      %s283 = sshll.u32 %s2, 4
      %s284 = int_to_ptr.hbm [resolvable:$true] %s283
      %286 = dma.vmem_to_hbm [thread:$0]  %s282, 32, %s284, [#allocation4]
    $region21: #{tpu_custom_call.1} parent=1 // pred_fallthru
      _
    // Predicated region
    $region22: #{tpu_custom_call.1} parent=1 // pred_check
      _
    $region23: #{tpu_custom_call.1} parent=1 // pred_check_branch
      %288 = sbr.rel (0) target = $region25
    $region24: #{tpu_custom_call.1} parent=1 // pred_region
      %290 = dma.done [#allocation4], 32
    $region25: #{tpu_custom_call.1} parent=1 // pred_fallthru
      _
    %291 = vsyncpa [#allocation3], 1
    %292 = vsyncpa [#allocation6], 1
    %293 = vsyncpa [#allocation4], 1

</llo_original>
